<compile_context>
chip_gen: v7x
topology: tpu7x:2x2x1
jax: 0.10.0
libtpu: 0.0.40
codegen_flags: <defaults>
</compile_context>

<pallas_src>
import functools

import jax
import jax.numpy as jnp
import numpy as np
from jax.experimental import pallas as pl
from jax.experimental.pallas import tpu as pltpu


def proj_kernel(x_ref, w_ref, at_ref, h_ref, f1_ref, f2_ref, *, compute_dtype):
    """One-shot projections: h = x @ W, f1 = h.a1 (N,1) column, f2 = h.a2 (1,N) row."""
    cdt = compute_dtype
    # MXU matmul with f32 accumulation (bf16 operands in the perf config).
    h32 = jnp.dot(x_ref[...].astype(cdt), w_ref[...].astype(cdt),
                  preferred_element_type=jnp.float32)           # (N, D) f32
    hc = h32.astype(h_ref.dtype)                                # what downstream consumes
    h_ref[...] = hc

    a1 = at_ref[0:1, :]                                         # (1, D) f32
    a2 = at_ref[1:2, :]                                         # (1, D) f32

    # f1_i = <h_i, a1>: VPU multiply + lane reduction, computed from the stored-precision
    # h so that f1 and f2 see identical operands (perf-review precision consistency).
    h_eff = hc.astype(jnp.float32)
    f1_ref[...] = jnp.sum(h_eff * a1, axis=-1, keepdims=True)   # (N, 1) f32

    # f2_j = <h_j, a2>, produced directly as a (1, N) row so the attention kernel never
    # needs an (N,1)->(1,N) cross-lane transpose.
    # TODO(synk): inspect pl.lower_as_mlir — if this M=1 dot_general forces a full (N,D)
    #             vxpose of h, switch to sum(h*a2,-1) + a single small relayout.
    f2_ref[...] = jax.lax.dot_general(
        a2.astype(cdt), hc,
        dimension_numbers=(((1,), (1,)), ((), ())),
        preferred_element_type=jnp.float32)                     # (1, N) f32


def attn_kernel(f1_ref, f2_ref, adj_ref, h_ref, o_ref, m_sc, l_sc, acc_sc,
                *, compute_dtype):
    """Flash-style (row x column)-tiled masked softmax attention + aggregation.

    f1_ref: (tm, 1) f32 query term (constant along kv axis), f2_ref: (1, tn) f32 key
    term, adj_ref: (tm, tn) int8, h_ref: (tn, D) compute_dtype, o_ref: (tm, D).
    Scratch: m_sc / l_sc (tm, 1) f32 running max / sum, acc_sc (tm, D) f32 accumulator.
    """
    j = pl.program_id(1)

    @pl.when(j == 0)
    def _():
        m_sc[...] = jnp.full(m_sc.shape, -jnp.inf, jnp.float32)
        l_sc[...] = jnp.zeros(l_sc.shape, jnp.float32)
        acc_sc[...] = jnp.zeros(acc_sc.shape, jnp.float32)

    e = f1_ref[...] + f2_ref[...]                               # (tm, tn) broadcast add
    e = jnp.maximum(e, 0.01 * e)                                # LeakyReLU: single vmax
    e = jnp.where(adj_ref[...] > 0, e, jnp.float32(-1e12))      # adjacency mask

    m_new = jnp.maximum(m_sc[...], jnp.max(e, axis=-1, keepdims=True))
    alpha = jnp.exp(m_sc[...] - m_new)                          # (tm, 1) f32 rescale

    # exp in compute_dtype: bf16 EUP on v6e/v7x (2x throughput, half the (tm,tn)
    # intermediate); pass compute_dtype=f32 on v5e (no bf16 VPU/EUP).
    p = jnp.exp((e - m_new).astype(compute_dtype))              # (tm, tn) compute_dtype

    # Running row-sum accumulated in f32 for accuracy.
    l_sc[...] = alpha * l_sc[...] + jnp.sum(p.astype(jnp.float32), axis=-1, keepdims=True)
    # Deferred softmax normalisation: accumulate unnormalised p @ h on the MXU; the
    # normalisation becomes one (tm, D) scale at the end instead of a (tm, N) multiply.
    acc_sc[...] = alpha * acc_sc[...] + jnp.dot(p, h_ref[...],
                                                preferred_element_type=jnp.float32)
    m_sc[...] = m_new

    @pl.when(j == pl.num_programs(1) - 1)
    def _():
        inv_l = pl.reciprocal(l_sc[...], approx=(compute_dtype != jnp.float32))
        o_ref[...] = (acc_sc[...] * inv_l).astype(o_ref.dtype)


def _kernel_b_vmem_bytes(tm, tn, D, compute_dtype, out_dtype):
    """Rough per-TC VMEM requirement for Kernel B: double-buffered streams + scratch,
    with lane padding on the narrow (.,1) f32 columns."""
    cs = jnp.dtype(compute_dtype).itemsize
    osz = jnp.dtype(out_dtype).itemsize
    lane = 128
    adj = 2 * tm * tn * 1            # int8 tiles, double-buffered
    h = 2 * tn * D * cs              # h column tiles
    f1 = 2 * tm * lane * 4           # (tm, 1) f32, lane-padded
    f2 = 2 * 8 * tn * 4              # (1, tn) f32, sublane-padded
    out = 2 * tm * D * osz
    scratch = 2 * tm * lane * 4 + tm * D * 4
    return adj + h + f1 + f2 + out + scratch


def multihead_gat_forward(input_h, adj, W, a, *, tm=256, tn=256,
                          compute_dtype=jnp.bfloat16, out_dtype=jnp.float32):
    N, in_dim = input_h.shape
    D = W.shape[1]
    assert a.shape == (2 * D, 1)
    f32 = jnp.float32

    # Pack [a1 ; a2] as a single (2, D) input: one DMA, no lane-sparse (D,1) buffers.
    a_t = a.reshape(2, D)

    # Ship the adjacency as int8 — it is the O(N^2) input that dominates HBM traffic.
    # TODO(synk): for very large N, bit-pack adj (1 bit/edge) and unpack with VPU bit
    #             ops (8x less adjacency HBM traffic; matters most on v6e).
    if adj.dtype != jnp.int8:
        adj = (adj > 0).astype(jnp.int8)

    # Tile sizes: tm=256 fills the 256-wide MXU on v6e/v7x (use 128 on v5e).  The kv
    # column tile tn bounds the (tm, tn) temporaries so VMEM stays flat as N grows —
    # required for v7x's 64 MiB/TC (each TC holds its own streams under the parallel
    # row axis).
    tm = min(tm, N)
    tn = min(tn, N)
    assert N % tm == 0 and N % tn == 0, "N must be a multiple of tm and tn"
    # int8 adjacency tiling constraints (min tile (32, 128)).
    assert tm % 32 == 0 or tm == N, "tm must be a multiple of 32 (int8 sublane tile)"
    assert tn % 128 == 0 or tn == N, "tn must be a multiple of 128 (lane tile)"

    # ---- Kernel A: one-shot projections (h, f1 column, f2 row). ----
    # TODO(synk): tile Kernel A over row blocks once N*(in_dim+D) stops fitting VMEM.
    h, f1, f2 = pl.pallas_call(
        functools.partial(proj_kernel, compute_dtype=compute_dtype),
        out_shape=(
            jax.ShapeDtypeStruct((N, D), compute_dtype),
            jax.ShapeDtypeStruct((N, 1), f32),
            jax.ShapeDtypeStruct((1, N), f32),
        ),
        in_specs=[
            pl.BlockSpec((N, in_dim), lambda: (0, 0)),
            pl.BlockSpec((in_dim, D), lambda: (0, 0)),
            pl.BlockSpec((2, D), lambda: (0, 0)),
        ],
        out_specs=(
            pl.BlockSpec((N, D), lambda: (0, 0)),
            pl.BlockSpec((N, 1), lambda: (0, 0)),
            pl.BlockSpec((1, N), lambda: (0, 0)),
        ),
    )(input_h, W, a_t)

    # VMEM request: actual estimate with 2x headroom, capped at 48 MiB so v7x (64 MiB
    # physical per TC) keeps headroom for compiler-internal scratch.
    vmem_limit = min(max(2 * _kernel_b_vmem_bytes(tm, tn, D, compute_dtype, out_dtype),
                         16 * 1024 * 1024),
                     48 * 1024 * 1024)

    # ---- Kernel B: flash-style masked softmax attention over (row, column) tiles. ----
    out = pl.pallas_call(
        functools.partial(attn_kernel, compute_dtype=compute_dtype),
        out_shape=jax.ShapeDtypeStruct((N, D), out_dtype),
        grid_spec=pltpu.PrefetchScalarGridSpec(
            num_scalar_prefetch=0,
            grid=(N // tm, N // tn),
            in_specs=[
                pl.BlockSpec((tm, 1), lambda i, j: (i, 0)),    # f1 row tile
                pl.BlockSpec((1, tn), lambda i, j: (0, j)),    # f2 column tile
                pl.BlockSpec((tm, tn), lambda i, j: (i, j)),   # adj tile (int8)
                pl.BlockSpec((tn, D), lambda i, j: (j, 0)),    # h column tile
            ],
            out_specs=pl.BlockSpec((tm, D), lambda i, j: (i, 0)),
            scratch_shapes=[
                pltpu.VMEM((tm, 1), f32),   # running max
                pltpu.VMEM((tm, 1), f32),   # running sum
                pltpu.VMEM((tm, D), f32),   # unnormalised output accumulator
            ],
        ),
        compiler_params=pltpu.CompilerParams(
            # Row tiles are independent -> shard across v7x's 2 TCs (no-op on v5e/v6e);
            # the kv reduction axis goes last and is "arbitrary".
            dimension_semantics=("parallel", "arbitrary"),
            vmem_limit_bytes=int(vmem_limit),
        ),
    )(f1, f2, adj, h)
    return out


def _xavier_uniform(key, shape, gain):
    fan_in, fan_out = shape[0], shape[1]
    bound = gain * float(np.sqrt(6.0 / (fan_in + fan_out)))
    return jax.random.uniform(key, shape, jnp.float32, -bound, bound)


def _reference(input_h, adj, W, a):
    # Plain-JAX reference mirroring the PyTorch forward (eval mode), full f32 precision.
    hp = jax.lax.Precision.HIGHEST
    h = jnp.dot(input_h, W, precision=hp)
    D = W.shape[1]
    a1, a2 = a[:D, :], a[D:, :]
    e = jnp.dot(h, a1, precision=hp) + jnp.dot(h, a2, precision=hp).T
    e = jnp.where(e > 0, e, 0.01 * e)
    att = jnp.where(adj > 0, e, -1e12)
    att = jax.nn.softmax(att, axis=1)
    return jnp.dot(att, h, precision=hp)


if __name__ == "__main__":
    # Small shapes: lane-dense output (D multiple of 128) and enough rows/cols that the
    # flash grid gets exercised with multiple tiles on both axes in the f32 check.
    N = 256
    input_dim = 64
    output_dim = 128
    gain = 1.414

    key = jax.random.PRNGKey(0)
    k_w, k_a, k_x, k_adj = jax.random.split(key, 4)

    W = _xavier_uniform(k_w, (input_dim, output_dim), gain)
    a = _xavier_uniform(k_a, (2 * output_dim, 1), gain)
    input_h = jax.random.normal(k_x, (N, input_dim), jnp.float32)

    adj_bool = jax.random.uniform(k_adj, (N, N)) > 0.5
    adj_bool = jnp.logical_or(adj_bool, jnp.eye(N, dtype=bool))   # ensure self-loops
    adj = adj_bool.astype(jnp.int8)

    ref = _reference(input_h, adj, W, a)

    # Exact-precision path (f32 everywhere), 2x2 flash grid: tight check of the math
    # including the online-softmax accumulation across kv tiles.
    out_f32 = multihead_gat_forward(input_h, adj, W, a, tm=128, tn=128,
                                    compute_dtype=jnp.float32, out_dtype=jnp.float32)
    out_f32 = jax.block_until_ready(out_f32)
    assert out_f32.shape == (N, output_dim)
    np.testing.assert_allclose(np.asarray(out_f32), np.asarray(ref),
                               rtol=1e-4, atol=1e-4)

    # Perf path (v6e/v7x config): bf16 MXU operands, bf16 exp, bf16 output, tm=tn=256.
    # Looser tolerance due to bf16 rounding; exact math verified by the f32 path above.
    out_bf16 = multihead_gat_forward(input_h, adj, W, a, tm=256, tn=256,
                                     compute_dtype=jnp.bfloat16, out_dtype=jnp.bfloat16)
    out_bf16 = jax.block_until_ready(out_bf16)
    np.testing.assert_allclose(np.asarray(out_bf16.astype(jnp.float32)),
                               np.asarray(ref), rtol=1e-1, atol=5e-2)

    print("KERNEL_OK")
</pallas_src>

<mosaic_0001>
module attributes {stable_mosaic.version = 11 : i64} {
  func.func @proj_kernel(%arg0: memref<256x64xf32, #tpu.memory_space<vmem>>, %arg1: memref<64x128xf32, #tpu.memory_space<vmem>>, %arg2: memref<2x128xf32, #tpu.memory_space<vmem>>, %arg3: memref<256x128xf32, #tpu.memory_space<vmem>>, %arg4: memref<256x1xf32, #tpu.memory_space<vmem>>, %arg5: memref<1x256xf32, #tpu.memory_space<vmem>>) attributes {dimension_semantics = [], scalar_prefetch = 0 : i64, scratch_operands = 0 : i64, tpu.core_type = #tpu.core_type<tc>} {
    %c0 = arith.constant 0 : index
    %c0_0 = arith.constant 0 : index
    %0 = vector.load %arg0[%c0, %c0_0] : memref<256x64xf32, #tpu.memory_space<vmem>>, vector<256x64xf32>
    %c0_1 = arith.constant 0 : index
    %c0_2 = arith.constant 0 : index
    %1 = vector.load %arg1[%c0_1, %c0_2] : memref<64x128xf32, #tpu.memory_space<vmem>>, vector<64x128xf32>
    %cst = arith.constant dense<0.000000e+00> : vector<256x128xf32>
    %2 = tpu.matmul %0, %1, %cst {dimension_numbers = #tpu.dot_dimension_numbers<[1], [0], [0], [1], [0, 0, 1, 1], [], []>} : vector<256x64xf32>, vector<64x128xf32>, vector<256x128xf32> -> vector<256x128xf32>
    %c0_3 = arith.constant 0 : index
    %c0_4 = arith.constant 0 : index
    %3 = vector.load %arg3[%c0_3, %c0_4] : memref<256x128xf32, #tpu.memory_space<vmem>>, vector<256x128xf32>
    tpu.vector_store %arg3[%c0_3, %c0_4], %2 {strides = array<i32>} : memref<256x128xf32, #tpu.memory_space<vmem>>, vector<256x128xf32>,
    %c0_5 = arith.constant 0 : index
    %c0_6 = arith.constant 0 : index
    %4 = vector.load %arg2[%c0_5, %c0_6] : memref<2x128xf32, #tpu.memory_space<vmem>>, vector<1x128xf32>
    %c1 = arith.constant 1 : index
    %c0_7 = arith.constant 0 : index
    %5 = vector.load %arg2[%c1, %c0_7] : memref<2x128xf32, #tpu.memory_space<vmem>>, vector<1x128xf32>
    %6 = vector.broadcast %4 : vector<1x128xf32> to vector<256x128xf32>
    %7 = arith.mulf %2, %6 : vector<256x128xf32>
    %cst_8 = arith.constant dense<0.000000e+00> : vector<256xf32>
    %8 = vector.multi_reduction <add>, %7, %cst_8 [1] : vector<256x128xf32> to vector<256xf32>
    %9 = vector.shape_cast %8 : vector<256xf32> to vector<256x1xf32>
    %c0_9 = arith.constant 0 : index
    %c0_10 = arith.constant 0 : index
    %10 = vector.load %arg4[%c0_9, %c0_10] : memref<256x1xf32, #tpu.memory_space<vmem>>, vector<256x1xf32>
    tpu.vector_store %arg4[%c0_9, %c0_10], %9 {strides = array<i32>} : memref<256x1xf32, #tpu.memory_space<vmem>>, vector<256x1xf32>,
    %cst_11 = arith.constant dense<0.000000e+00> : vector<1x256xf32>
    %11 = tpu.matmul %5, %2, %cst_11 {dimension_numbers = #tpu.dot_dimension_numbers<[1], [1], [0], [0], [0, 0, 1, 0], [], []>} : vector<1x128xf32>, vector<256x128xf32>, vector<1x256xf32> -> vector<1x256xf32>
    %c0_12 = arith.constant 0 : index
    %c0_13 = arith.constant 0 : index
    %12 = vector.load %arg5[%c0_12, %c0_13] : memref<1x256xf32, #tpu.memory_space<vmem>>, vector<1x256xf32>
    tpu.vector_store %arg5[%c0_12, %c0_13], %11 {strides = array<i32>} : memref<1x256xf32, #tpu.memory_space<vmem>>, vector<1x256xf32>,
    return
  }
}

</mosaic_0001>

<llo_original>
// kernel: tpu_custom_call.1
$region0: #{tpu_custom_call.1}
  #allocation0 [shape = 'u32[]', space=smem, size = 0x4, offset = 0x4, fixed_abs, tag = 'smem constant byte address 0x4 - core index']
  #allocation1 [shape = 'u32[144,128]{1,0:T(1,128)}', space=vmem, size = 0x12000, scoped, tag = 'internal scratch']
  %s0 = inlined_call_operand.vmem [shape: f32[256,64], index: 0, kind: input, shape index: {}]
  %s1 = inlined_call_operand.vmem [shape: f32[64,128], index: 1, kind: input, shape index: {}]
  %s2 = inlined_call_operand.vmem [shape: f32[2,128], index: 2, kind: input, shape index: {}]
  %s3 = inlined_call_operand.hbm [shape: f32[256,128], index: 3, kind: output, shape index: {0}]
  %s4 = inlined_call_operand.vmem [shape: f32[256,1], index: 4, kind: output, shape index: {1}]
  %s5 = inlined_call_operand.hbm [shape: f32[1,256], index: 5, kind: output, shape index: {2}]
  %6 = xla_tuple %s3, %s4, %s5
  %s7 = sld [smem:[#allocation0]]
  $region38: #{tpu_custom_call.1} parent=0
    _
  %s9 = ssub.s32 1, %s7
  %s10 = scalar_select 0, %s9, %s7
  $region1: #{tpu_custom_call.1} parent=0
    #allocation2 [shape = 'u8[131072]{0}', space=vmem, size = 0x20000, scoped, tag = 'output window, operand 0, single buffered']
    #allocation3 [shape = 's32[1]{0}', space=sflag, size = 0x4, scoped, tag = 'scoped memory for tpu_custom_call.1']
    #allocation4 [shape = 'u8[1024]{0}', space=vmem, size = 0x400, scoped, tag = 'output window, operand 2, single buffered']
    #allocation5 [shape = 's32[1]{0}', space=sflag, size = 0x4, scoped, tag = 'scoped memory for tpu_custom_call.1']
    %11 = vsyncpa [#allocation3], 0
    %12 = vsyncpa [#allocation5], 0
    // Predicated region
    $region2: #{tpu_custom_call.1} parent=1 // pred_check
      _
    $region3: #{tpu_custom_call.1} parent=1 // pred_check_branch
      %14 = sbr.rel (0) target = $region5
    $region4: #{tpu_custom_call.1} parent=1 // pred_region
      _
    $region5: #{tpu_custom_call.1} parent=1 // pred_fallthru
      _
    // Predicated region
    $region6: #{tpu_custom_call.1} parent=1 // pred_check
      _
    $region7: #{tpu_custom_call.1} parent=1 // pred_check_branch
      %16 = sbr.rel (0) target = $region9
    $region8: #{tpu_custom_call.1} parent=1 // pred_region
      _
    $region9: #{tpu_custom_call.1} parent=1 // pred_fallthru
      _
    // Predicated region
    $region10: #{tpu_custom_call.1} parent=1 // pred_check
      _
    $region11: #{tpu_custom_call.1} parent=1 // pred_check_branch
      %18 = sbr.rel (0) target = $region13
    $region12: #{tpu_custom_call.1} parent=1 // pred_region
      _
    $region13: #{tpu_custom_call.1} parent=1 // pred_fallthru
      _
    %v19 = vld [vmem:[%s0] sm:$0xff]
    %v20 = vld [vmem:[%s0 + $0x8] sm:$0xff]
    %v21 = vld [vmem:[%s0 + $0x10] sm:$0xff]
    %v22 = vld [vmem:[%s0 + $0x18] sm:$0xff]
    %v23 = vld [vmem:[%s0 + $0x20] sm:$0xff]
    %v24 = vld [vmem:[%s0 + $0x28] sm:$0xff]
    %v25 = vld [vmem:[%s0 + $0x30] sm:$0xff]
    %v26 = vld [vmem:[%s0 + $0x38] sm:$0xff]
    %v27 = vld [vmem:[%s0 + $0x40] sm:$0xff]
    %v28 = vld [vmem:[%s0 + $0x48] sm:$0xff]
    %v29 = vld [vmem:[%s0 + $0x50] sm:$0xff]
    %v30 = vld [vmem:[%s0 + $0x58] sm:$0xff]
    %v31 = vld [vmem:[%s0 + $0x60] sm:$0xff]
    %v32 = vld [vmem:[%s0 + $0x68] sm:$0xff]
    %v33 = vld [vmem:[%s0 + $0x70] sm:$0xff]
    %v34 = vld [vmem:[%s0 + $0x78] sm:$0xff]
    %v35 = vld [vmem:[%s0 + $0x80] sm:$0xff]
    %v36 = vld [vmem:[%s0 + $0x88] sm:$0xff]
    %v37 = vld [vmem:[%s0 + $0x90] sm:$0xff]
    %v38 = vld [vmem:[%s0 + $0x98] sm:$0xff]
    %v39 = vld [vmem:[%s0 + $0xa0] sm:$0xff]
    %v40 = vld [vmem:[%s0 + $0xa8] sm:$0xff]
    %v41 = vld [vmem:[%s0 + $0xb0] sm:$0xff]
    %v42 = vld [vmem:[%s0 + $0xb8] sm:$0xff]
    %v43 = vld [vmem:[%s0 + $0xc0] sm:$0xff]
    %v44 = vld [vmem:[%s0 + $0xc8] sm:$0xff]
    %v45 = vld [vmem:[%s0 + $0xd0] sm:$0xff]
    %v46 = vld [vmem:[%s0 + $0xd8] sm:$0xff]
    %v47 = vld [vmem:[%s0 + $0xe0] sm:$0xff]
    %v48 = vld [vmem:[%s0 + $0xe8] sm:$0xff]
    %v49 = vld [vmem:[%s0 + $0xf0] sm:$0xff]
    %v50 = vld [vmem:[%s0 + $0xf8] sm:$0xff]
    %v51 = vld [vmem:[%s1] sm:$0xff]
    %v52 = vld [vmem:[%s1 + $0x8] sm:$0xff]
    %v53 = vld [vmem:[%s1 + $0x10] sm:$0xff]
    %v54 = vld [vmem:[%s1 + $0x18] sm:$0xff]
    %v55 = vld [vmem:[%s1 + $0x20] sm:$0xff]
    %v56 = vld [vmem:[%s1 + $0x28] sm:$0xff]
    %v57 = vld [vmem:[%s1 + $0x30] sm:$0xff]
    %v58 = vld [vmem:[%s1 + $0x38] sm:$0xff]
    %vm59 = vcmask 523264
    %v61 = vsel %vm59, %v19, 0
    %v64 = vsel %vm59, %v20, 0
    %v67 = vsel %vm59, %v21, 0
    %v70 = vsel %vm59, %v22, 0
    %v73 = vsel %vm59, %v23, 0
    %v76 = vsel %vm59, %v24, 0
    %v79 = vsel %vm59, %v25, 0
    %v82 = vsel %vm59, %v26, 0
    %v85 = vsel %vm59, %v27, 0
    %v88 = vsel %vm59, %v28, 0
    %v91 = vsel %vm59, %v29, 0
    %v94 = vsel %vm59, %v30, 0
    %v97 = vsel %vm59, %v31, 0
    %v100 = vsel %vm59, %v32, 0
    %v103 = vsel %vm59, %v33, 0
    %v106 = vsel %vm59, %v34, 0
    %v109 = vsel %vm59, %v35, 0
    %v112 = vsel %vm59, %v36, 0
    %v115 = vsel %vm59, %v37, 0
    %v118 = vsel %vm59, %v38, 0
    %v121 = vsel %vm59, %v39, 0
    %v124 = vsel %vm59, %v40, 0
    %v127 = vsel %vm59, %v41, 0
    %v130 = vsel %vm59, %v42, 0
    %v133 = vsel %vm59, %v43, 0
    %v136 = vsel %vm59, %v44, 0
    %v139 = vsel %vm59, %v45, 0
    %v142 = vsel %vm59, %v46, 0
    %v145 = vsel %vm59, %v47, 0
    %v148 = vsel %vm59, %v48, 0
    %v151 = vsel %vm59, %v49, 0
    %v154 = vsel %vm59, %v50, 0
    %156 = vmatprep.subr.mxu0 0.0
    %157 = vmatpush1.msra.mxu0 %v51
    %158 = vmatprep.subr.mxu0 0.0
    %159 = vmatpush1.msra.mxu0 %v52
    %160 = vmatprep.subr.mxu0 0.0
    %161 = vmatpush1.msra.mxu0 %v53
    %162 = vmatprep.subr.mxu0 0.0
    %163 = vmatpush1.msra.mxu0 %v54
    %164 = vmatprep.subr.mxu0 0.0
    %165 = vmatpush1.msra.mxu0 %v55
    %166 = vmatprep.subr.mxu0 0.0
    %167 = vmatpush1.msra.mxu0 %v56
    %168 = vmatprep.subr.mxu0 0.0
    %169 = vmatpush1.msra.mxu0 %v57
    %170 = vmatprep.subr.mxu0 0.0
    %171 = vmatpush1.msra.mxu0 %v58
    %172 = vmatprep.subr.mxu0 0.0
    %173 = vmatpush1.msra.mxu0 0.0
    %174 = vmatprep.subr.mxu0 0.0
    %175 = vmatpush1.msra.mxu0 0.0
    %176 = vmatprep.subr.mxu0 0.0
    %177 = vmatpush1.msra.mxu0 0.0
    %178 = vmatprep.subr.mxu0 0.0
    %179 = vmatpush1.msra.mxu0 0.0
    %180 = vmatprep.subr.mxu0 0.0
    %181 = vmatpush1.msra.mxu0 0.0
    %182 = vmatprep.subr.mxu0 0.0
    %183 = vmatpush1.msra.mxu0 0.0
    %184 = vmatprep.subr.mxu0 0.0
    %185 = vmatpush1.msra.mxu0 0.0
    %186 = vmatprep.subr.mxu0 0.0
    %187 = vmatpush1.msra.mxu0 0.0
    %188 = vmatprep.subr.mxu0 0.0
    %189 = vmatpush1.msra.mxu0 0.0
    %190 = vmatprep.subr.mxu0 0.0
    %191 = vmatpush1.msra.mxu0 0.0
    %192 = vmatprep.subr.mxu0 0.0
    %193 = vmatpush1.msra.mxu0 0.0
    %194 = vmatprep.subr.mxu0 0.0
    %195 = vmatpush1.msra.mxu0 0.0
    %196 = vmatprep.subr.mxu0 0.0
    %197 = vmatpush1.msra.mxu0 0.0
    %198 = vmatprep.subr.mxu0 0.0
    %199 = vmatpush1.msra.mxu0 0.0
    %200 = vmatprep.subr.mxu0 0.0
    %201 = vmatpush1.msra.mxu0 0.0
    %202 = vmatprep.subr.mxu0 0.0
    %203 = vmatpush1.msra.mxu0 0.0
    %204 = vmatprep.subr.mxu0 0.0
    %205 = vmatpush1.msra.mxu0 0.0
    %206 = vmatprep.subr.mxu0 0.0
    %207 = vmatpush1.msra.mxu0 0.0
    %208 = vmatprep.subr.mxu0 0.0
    %209 = vmatpush1.msra.mxu0 0.0
    %210 = vmatprep.subr.mxu0 0.0
    %211 = vmatpush1.msra.mxu0 0.0
    %212 = vmatprep.subr.mxu0 0.0
    %213 = vmatpush1.msra.mxu0 0.0
    %214 = vmatprep.subr.mxu0 0.0
    %215 = vmatpush1.msra.mxu0 0.0
    %216 = vmatprep.subr.mxu0 0.0
    %217 = vmatpush1.msra.mxu0 0.0
    %218 = vmatprep.subr.mxu0 0.0
    %219 = vmatpush1.msra.mxu0 0.0
    %220 = vmatprep.mubr.f32.mxu0 0.0
    %221 = vmatmul.mubr.f32.gmra.mrb[0].mxu0 %v61
    %v222 = vpop.f32.mrb[0].mxu0
    %v223 = vadd.f32 0.0, %v222
    %v224 = vpop.f32.mrb[0].mxu0
    %225 = vmatprep.mubr.f32.mxu0 0.0
    %226 = vmatmul.mubr.f32.gmra.mrb[0].mxu0 %v64
    %v227 = vpop.f32.mrb[0].mxu0
    %v228 = vadd.f32 0.0, %v227
    %v229 = vpop.f32.mrb[0].mxu0
    %230 = vmatprep.mubr.f32.mxu0 0.0
    %231 = vmatmul.mubr.f32.gmra.mrb[0].mxu0 %v67
    %v232 = vpop.f32.mrb[0].mxu0
    %v233 = vadd.f32 0.0, %v232
    %v234 = vpop.f32.mrb[0].mxu0
    %235 = vmatprep.mubr.f32.mxu0 0.0
    %236 = vmatmul.mubr.f32.gmra.mrb[0].mxu0 %v70
    %v237 = vpop.f32.mrb[0].mxu0
    %v238 = vadd.f32 0.0, %v237
    %v239 = vpop.f32.mrb[0].mxu0
    %240 = vmatprep.mubr.f32.mxu0 0.0
    %241 = vmatmul.mubr.f32.gmra.mrb[0].mxu0 %v73
    %v242 = vpop.f32.mrb[0].mxu0
    %v243 = vadd.f32 0.0, %v242
    %v244 = vpop.f32.mrb[0].mxu0
    %245 = vmatprep.mubr.f32.mxu0 0.0
    %246 = vmatmul.mubr.f32.gmra.mrb[0].mxu0 %v76
    %v247 = vpop.f32.mrb[0].mxu0
    %v248 = vadd.f32 0.0, %v247
    %v249 = vpop.f32.mrb[0].mxu0
    %250 = vmatprep.mubr.f32.mxu0 0.0
    %251 = vmatmul.mubr.f32.gmra.mrb[0].mxu0 %v79
    %v252 = vpop.f32.mrb[0].mxu0
    %v253 = vadd.f32 0.0, %v252
    %v254 = vpop.f32.mrb[0].mxu0
    %255 = vmatprep.mubr.f32.mxu0 0.0
    %256 = vmatmul.mubr.f32.gmra.mrb[0].mxu0 %v82
    %v257 = vpop.f32.mrb[0].mxu0
    %v258 = vadd.f32 0.0, %v257
    %v259 = vpop.f32.mrb[0].mxu0
    %260 = vmatprep.mubr.f32.mxu0 0.0
    %261 = vmatmul.mubr.f32.gmra.mrb[0].mxu0 %v85
    %v262 = vpop.f32.mrb[0].mxu0
    %v263 = vadd.f32 0.0, %v262
    %v264 = vpop.f32.mrb[0].mxu0
    %265 = vmatprep.mubr.f32.mxu0 0.0
    %266 = vmatmul.mubr.f32.gmra.mrb[0].mxu0 %v88
    %v267 = vpop.f32.mrb[0].mxu0
    %v268 = vadd.f32 0.0, %v267
    %v269 = vpop.f32.mrb[0].mxu0
    %270 = vmatprep.mubr.f32.mxu0 0.0
    %271 = vmatmul.mubr.f32.gmra.mrb[0].mxu0 %v91
    %v272 = vpop.f32.mrb[0].mxu0
    %v273 = vadd.f32 0.0, %v272
    %v274 = vpop.f32.mrb[0].mxu0
    %275 = vmatprep.mubr.f32.mxu0 0.0
    %276 = vmatmul.mubr.f32.gmra.mrb[0].mxu0 %v94
    %v277 = vpop.f32.mrb[0].mxu0
    %v278 = vadd.f32 0.0, %v277
    %v279 = vpop.f32.mrb[0].mxu0
    %280 = vmatprep.mubr.f32.mxu0 0.0
    %281 = vmatmul.mubr.f32.gmra.mrb[0].mxu0 %v97
    %v282 = vpop.f32.mrb[0].mxu0
    %v283 = vadd.f32 0.0, %v282
    %v284 = vpop.f32.mrb[0].mxu0
    %285 = vmatprep.mubr.f32.mxu0 0.0
    %286 = vmatmul.mubr.f32.gmra.mrb[0].mxu0 %v100
    %v287 = vpop.f32.mrb[0].mxu0
    %v288 = vadd.f32 0.0, %v287
    %v289 = vpop.f32.mrb[0].mxu0
    %290 = vmatprep.mubr.f32.mxu0 0.0
    %291 = vmatmul.mubr.f32.gmra.mrb[0].mxu0 %v103
    %v292 = vpop.f32.mrb[0].mxu0
    %v293 = vadd.f32 0.0, %v292
    %v294 = vpop.f32.mrb[0].mxu0
    %295 = vmatprep.mubr.f32.mxu0 0.0
    %296 = vmatmul.mubr.f32.gmra.mrb[0].mxu0 %v106
    %v297 = vpop.f32.mrb[0].mxu0
    %v298 = vadd.f32 0.0, %v297
    %v299 = vpop.f32.mrb[0].mxu0
    %300 = vmatprep.mubr.f32.mxu0 0.0
    %301 = vmatmul.mubr.f32.gmra.mrb[0].mxu0 %v109
    %v302 = vpop.f32.mrb[0].mxu0
    %v303 = vadd.f32 0.0, %v302
    %v304 = vpop.f32.mrb[0].mxu0
    %305 = vmatprep.mubr.f32.mxu0 0.0
    %306 = vmatmul.mubr.f32.gmra.mrb[0].mxu0 %v112
    %v307 = vpop.f32.mrb[0].mxu0
    %v308 = vadd.f32 0.0, %v307
    %v309 = vpop.f32.mrb[0].mxu0
    %310 = vmatprep.mubr.f32.mxu0 0.0
    %311 = vmatmul.mubr.f32.gmra.mrb[0].mxu0 %v115
    %v312 = vpop.f32.mrb[0].mxu0
    %v313 = vadd.f32 0.0, %v312
    %v314 = vpop.f32.mrb[0].mxu0
    %315 = vmatprep.mubr.f32.mxu0 0.0
    %316 = vmatmul.mubr.f32.gmra.mrb[0].mxu0 %v118
    %v317 = vpop.f32.mrb[0].mxu0
    %v318 = vadd.f32 0.0, %v317
    %v319 = vpop.f32.mrb[0].mxu0
    %320 = vmatprep.mubr.f32.mxu0 0.0
    %321 = vmatmul.mubr.f32.gmra.mrb[0].mxu0 %v121
    %v322 = vpop.f32.mrb[0].mxu0
    %v323 = vadd.f32 0.0, %v322
    %v324 = vpop.f32.mrb[0].mxu0
    %325 = vmatprep.mubr.f32.mxu0 0.0
    %326 = vmatmul.mubr.f32.gmra.mrb[0].mxu0 %v124
    %v327 = vpop.f32.mrb[0].mxu0
    %v328 = vadd.f32 0.0, %v327
    %v329 = vpop.f32.mrb[0].mxu0
    %330 = vmatprep.mubr.f32.mxu0 0.0
    %331 = vmatmul.mubr.f32.gmra.mrb[0].mxu0 %v127
    %v332 = vpop.f32.mrb[0].mxu0
    %v333 = vadd.f32 0.0, %v332
    %v334 = vpop.f32.mrb[0].mxu0
    %335 = vmatprep.mubr.f32.mxu0 0.0
    %336 = vmatmul.mubr.f32.gmra.mrb[0].mxu0 %v130
    %v337 = vpop.f32.mrb[0].mxu0
    %v338 = vadd.f32 0.0, %v337
    %v339 = vpop.f32.mrb[0].mxu0
    %340 = vmatprep.mubr.f32.mxu0 0.0
    %341 = vmatmul.mubr.f32.gmra.mrb[0].mxu0 %v133
    %v342 = vpop.f32.mrb[0].mxu0
    %v343 = vadd.f32 0.0, %v342
    %v344 = vpop.f32.mrb[0].mxu0
    %345 = vmatprep.mubr.f32.mxu0 0.0
    %346 = vmatmul.mubr.f32.gmra.mrb[0].mxu0 %v136
    %v347 = vpop.f32.mrb[0].mxu0
    %v348 = vadd.f32 0.0, %v347
    %v349 = vpop.f32.mrb[0].mxu0
    %350 = vmatprep.mubr.f32.mxu0 0.0
    %351 = vmatmul.mubr.f32.gmra.mrb[0].mxu0 %v139
    %v352 = vpop.f32.mrb[0].mxu0
    %v353 = vadd.f32 0.0, %v352
    %v354 = vpop.f32.mrb[0].mxu0
    %355 = vmatprep.mubr.f32.mxu0 0.0
    %356 = vmatmul.mubr.f32.gmra.mrb[0].mxu0 %v142
    %v357 = vpop.f32.mrb[0].mxu0
    %v358 = vadd.f32 0.0, %v357
    %v359 = vpop.f32.mrb[0].mxu0
    %360 = vmatprep.mubr.f32.mxu0 0.0
    %361 = vmatmul.mubr.f32.gmra.mrb[0].mxu0 %v145
    %v362 = vpop.f32.mrb[0].mxu0
    %v363 = vadd.f32 0.0, %v362
    %v364 = vpop.f32.mrb[0].mxu0
    %365 = vmatprep.mubr.f32.mxu0 0.0
    %366 = vmatmul.mubr.f32.gmra.mrb[0].mxu0 %v148
    %v367 = vpop.f32.mrb[0].mxu0
    %v368 = vadd.f32 0.0, %v367
    %v369 = vpop.f32.mrb[0].mxu0
    %370 = vmatprep.mubr.f32.mxu0 0.0
    %371 = vmatmul.mubr.f32.gmra.mrb[0].mxu0 %v151
    %v372 = vpop.f32.mrb[0].mxu0
    %v373 = vadd.f32 0.0, %v372
    %v374 = vpop.f32.mrb[0].mxu0
    %375 = vmatprep.mubr.f32.mxu0 0.0
    %376 = vmatmul.mubr.f32.gmra.mrb[0].mxu0 %v154
    %v377 = vpop.f32.mrb[0].mxu0
    %v378 = vadd.f32 0.0, %v377
    %v379 = vpop.f32.mrb[0].mxu0
    %380 = vdwg.mxu0
    %381 = vst [vmem:[#allocation2] sm:$0xff] %v223
    %382 = vst [vmem:[#allocation2 + $0x8] sm:$0xff] %v228
    %383 = vst [vmem:[#allocation2 + $0x10] sm:$0xff] %v233
    %384 = vst [vmem:[#allocation2 + $0x18] sm:$0xff] %v238
    %385 = vst [vmem:[#allocation2 + $0x20] sm:$0xff] %v243
    %386 = vst [vmem:[#allocation2 + $0x28] sm:$0xff] %v248
    %387 = vst [vmem:[#allocation2 + $0x30] sm:$0xff] %v253
    %388 = vst [vmem:[#allocation2 + $0x38] sm:$0xff] %v258
    %389 = vst [vmem:[#allocation2 + $0x40] sm:$0xff] %v263
    %390 = vst [vmem:[#allocation2 + $0x48] sm:$0xff] %v268
    %391 = vst [vmem:[#allocation2 + $0x50] sm:$0xff] %v273
    %392 = vst [vmem:[#allocation2 + $0x58] sm:$0xff] %v278
    %393 = vst [vmem:[#allocation2 + $0x60] sm:$0xff] %v283
    %394 = vst [vmem:[#allocation2 + $0x68] sm:$0xff] %v288
    %395 = vst [vmem:[#allocation2 + $0x70] sm:$0xff] %v293
    %396 = vst [vmem:[#allocation2 + $0x78] sm:$0xff] %v298
    %397 = vst [vmem:[#allocation2 + $0x80] sm:$0xff] %v303
    %398 = vst [vmem:[#allocation2 + $0x88] sm:$0xff] %v308
    %399 = vst [vmem:[#allocation2 + $0x90] sm:$0xff] %v313
    %400 = vst [vmem:[#allocation2 + $0x98] sm:$0xff] %v318
    %401 = vst [vmem:[#allocation2 + $0xa0] sm:$0xff] %v323
    %402 = vst [vmem:[#allocation2 + $0xa8] sm:$0xff] %v328
    %403 = vst [vmem:[#allocation2 + $0xb0] sm:$0xff] %v333
    %404 = vst [vmem:[#allocation2 + $0xb8] sm:$0xff] %v338
    %405 = vst [vmem:[#allocation2 + $0xc0] sm:$0xff] %v343
    %406 = vst [vmem:[#allocation2 + $0xc8] sm:$0xff] %v348
    %407 = vst [vmem:[#allocation2 + $0xd0] sm:$0xff] %v353
    %408 = vst [vmem:[#allocation2 + $0xd8] sm:$0xff] %v358
    %409 = vst [vmem:[#allocation2 + $0xe0] sm:$0xff] %v363
    %410 = vst [vmem:[#allocation2 + $0xe8] sm:$0xff] %v368
    %411 = vst [vmem:[#allocation2 + $0xf0] sm:$0xff] %v373
    %412 = vst [vmem:[#allocation2 + $0xf8] sm:$0xff] %v378
    %v413 = vld [vmem:[%s2] sm:$0x1]
    %v414 = vld [vmem:[%s2 + $0x1] sm:$0x1]
    %v415 = vlaneseq
    %v416 = vshrl.u32 %v415, 7
    %v417 = vsub.s32 0, %v416
    %v418 = vrot.slane %v413, %v417
    %v419 = vmul.f32 %v223, %v418
    %v420 = vmul.f32 %v228, %v418
    %v421 = vmul.f32 %v233, %v418
    %v422 = vmul.f32 %v238, %v418
    %v423 = vmul.f32 %v243, %v418
    %v424 = vmul.f32 %v248, %v418
    %v425 = vmul.f32 %v253, %v418
    %v426 = vmul.f32 %v258, %v418
    %v427 = vmul.f32 %v263, %v418
    %v428 = vmul.f32 %v268, %v418
    %v429 = vmul.f32 %v273, %v418
    %v430 = vmul.f32 %v278, %v418
    %v431 = vmul.f32 %v283, %v418
    %v432 = vmul.f32 %v288, %v418
    %v433 = vmul.f32 %v293, %v418
    %v434 = vmul.f32 %v298, %v418
    %v435 = vmul.f32 %v303, %v418
    %v436 = vmul.f32 %v308, %v418
    %v437 = vmul.f32 %v313, %v418
    %v438 = vmul.f32 %v318, %v418
    %v439 = vmul.f32 %v323, %v418
    %v440 = vmul.f32 %v328, %v418
    %v441 = vmul.f32 %v333, %v418
    %v442 = vmul.f32 %v338, %v418
    %v443 = vmul.f32 %v343, %v418
    %v444 = vmul.f32 %v348, %v418
    %v445 = vmul.f32 %v353, %v418
    %v446 = vmul.f32 %v358, %v418
    %v447 = vmul.f32 %v363, %v418
    %v448 = vmul.f32 %v368, %v418
    %v449 = vmul.f32 %v373, %v418
    %v450 = vmul.f32 %v378, %v418
    %451 = vadd.xlane.f32.xlu0 %v419
    %v452 = vpop.xlane.xlu0 %451
    %453 = vadd.xlane.f32.xlu0 %v420
    %v454 = vpop.xlane.xlu0 %453
    %455 = vadd.xlane.f32.xlu0 %v421
    %v456 = vpop.xlane.xlu0 %455
    %457 = vadd.xlane.f32.xlu0 %v422
    %v458 = vpop.xlane.xlu0 %457
    %459 = vadd.xlane.f32.xlu0 %v423
    %v460 = vpop.xlane.xlu0 %459
    %461 = vadd.xlane.f32.xlu0 %v424
    %v462 = vpop.xlane.xlu0 %461
    %463 = vadd.xlane.f32.xlu0 %v425
    %v464 = vpop.xlane.xlu0 %463
    %465 = vadd.xlane.f32.xlu0 %v426
    %v466 = vpop.xlane.xlu0 %465
    %467 = vadd.xlane.f32.xlu0 %v427
    %v468 = vpop.xlane.xlu0 %467
    %469 = vadd.xlane.f32.xlu0 %v428
    %v470 = vpop.xlane.xlu0 %469
    %471 = vadd.xlane.f32.xlu0 %v429
    %v472 = vpop.xlane.xlu0 %471
    %473 = vadd.xlane.f32.xlu0 %v430
    %v474 = vpop.xlane.xlu0 %473
    %475 = vadd.xlane.f32.xlu0 %v431
    %v476 = vpop.xlane.xlu0 %475
    %477 = vadd.xlane.f32.xlu0 %v432
    %v478 = vpop.xlane.xlu0 %477
    %479 = vadd.xlane.f32.xlu0 %v433
    %v480 = vpop.xlane.xlu0 %479
    %481 = vadd.xlane.f32.xlu0 %v434
    %v482 = vpop.xlane.xlu0 %481
    %483 = vadd.xlane.f32.xlu0 %v435
    %v484 = vpop.xlane.xlu0 %483
    %485 = vadd.xlane.f32.xlu0 %v436
    %v486 = vpop.xlane.xlu0 %485
    %487 = vadd.xlane.f32.xlu0 %v437
    %v488 = vpop.xlane.xlu0 %487
    %489 = vadd.xlane.f32.xlu0 %v438
    %v490 = vpop.xlane.xlu0 %489
    %491 = vadd.xlane.f32.xlu0 %v439
    %v492 = vpop.xlane.xlu0 %491
    %493 = vadd.xlane.f32.xlu0 %v440
    %v494 = vpop.xlane.xlu0 %493
    %495 = vadd.xlane.f32.xlu0 %v441
    %v496 = vpop.xlane.xlu0 %495
    %497 = vadd.xlane.f32.xlu0 %v442
    %v498 = vpop.xlane.xlu0 %497
    %499 = vadd.xlane.f32.xlu0 %v443
    %v500 = vpop.xlane.xlu0 %499
    %501 = vadd.xlane.f32.xlu0 %v444
    %v502 = vpop.xlane.xlu0 %501
    %503 = vadd.xlane.f32.xlu0 %v445
    %v504 = vpop.xlane.xlu0 %503
    %505 = vadd.xlane.f32.xlu0 %v446
    %v506 = vpop.xlane.xlu0 %505
    %507 = vadd.xlane.f32.xlu0 %v447
    %v508 = vpop.xlane.xlu0 %507
    %509 = vadd.xlane.f32.xlu0 %v448
    %v510 = vpop.xlane.xlu0 %509
    %511 = vadd.xlane.f32.xlu0 %v449
    %v512 = vpop.xlane.xlu0 %511
    %513 = vadd.xlane.f32.xlu0 %v450
    %v514 = vpop.xlane.xlu0 %513
    %vm515 = vcmask 7168
    %516 = vst.msk [vmem:[%s4] sm:$0xff] %vm515, %v452
    %517 = vst.msk [vmem:[%s4 + $0x8] sm:$0xff] %vm515, %v454
    %518 = vst.msk [vmem:[%s4 + $0x10] sm:$0xff] %vm515, %v456
    %519 = vst.msk [vmem:[%s4 + $0x18] sm:$0xff] %vm515, %v458
    %520 = vst.msk [vmem:[%s4 + $0x20] sm:$0xff] %vm515, %v460
    %521 = vst.msk [vmem:[%s4 + $0x28] sm:$0xff] %vm515, %v462
    %522 = vst.msk [vmem:[%s4 + $0x30] sm:$0xff] %vm515, %v464
    %523 = vst.msk [vmem:[%s4 + $0x38] sm:$0xff] %vm515, %v466
    %524 = vst.msk [vmem:[%s4 + $0x40] sm:$0xff] %vm515, %v468
    %525 = vst.msk [vmem:[%s4 + $0x48] sm:$0xff] %vm515, %v470
    %526 = vst.msk [vmem:[%s4 + $0x50] sm:$0xff] %vm515, %v472
    %527 = vst.msk [vmem:[%s4 + $0x58] sm:$0xff] %vm515, %v474
    %528 = vst.msk [vmem:[%s4 + $0x60] sm:$0xff] %vm515, %v476
    %529 = vst.msk [vmem:[%s4 + $0x68] sm:$0xff] %vm515, %v478
    %530 = vst.msk [vmem:[%s4 + $0x70] sm:$0xff] %vm515, %v480
    %531 = vst.msk [vmem:[%s4 + $0x78] sm:$0xff] %vm515, %v482
    %532 = vst.msk [vmem:[%s4 + $0x80] sm:$0xff] %vm515, %v484
    %533 = vst.msk [vmem:[%s4 + $0x88] sm:$0xff] %vm515, %v486
    %534 = vst.msk [vmem:[%s4 + $0x90] sm:$0xff] %vm515, %v488
    %535 = vst.msk [vmem:[%s4 + $0x98] sm:$0xff] %vm515, %v490
    %536 = vst.msk [vmem:[%s4 + $0xa0] sm:$0xff] %vm515, %v492
    %537 = vst.msk [vmem:[%s4 + $0xa8] sm:$0xff] %vm515, %v494
    %538 = vst.msk [vmem:[%s4 + $0xb0] sm:$0xff] %vm515, %v496
    %539 = vst.msk [vmem:[%s4 + $0xb8] sm:$0xff] %vm515, %v498
    %540 = vst.msk [vmem:[%s4 + $0xc0] sm:$0xff] %vm515, %v500
    %541 = vst.msk [vmem:[%s4 + $0xc8] sm:$0xff] %vm515, %v502
    %542 = vst.msk [vmem:[%s4 + $0xd0] sm:$0xff] %vm515, %v504
    %543 = vst.msk [vmem:[%s4 + $0xd8] sm:$0xff] %vm515, %v506
    %544 = vst.msk [vmem:[%s4 + $0xe0] sm:$0xff] %vm515, %v508
    %545 = vst.msk [vmem:[%s4 + $0xe8] sm:$0xff] %vm515, %v510
    %546 = vst.msk [vmem:[%s4 + $0xf0] sm:$0xff] %vm515, %v512
    %547 = vst.msk [vmem:[%s4 + $0xf8] sm:$0xff] %vm515, %v514
    %548 = vmatprep.subr.mxu0 0.0
    %549 = vmatpush1.xpose.msra.mxu0 %v223
    %550 = vmatprep.subr.mxu0 0.0
    %551 = vmatpush1.xpose.msra.mxu0 %v228
    %552 = vmatprep.subr.mxu0 0.0
    %553 = vmatpush1.xpose.msra.mxu0 %v233
    %554 = vmatprep.subr.mxu0 0.0
    %555 = vmatpush1.xpose.msra.mxu0 %v238
    %556 = vmatprep.subr.mxu0 0.0
    %557 = vmatpush1.xpose.msra.mxu0 %v243
    %558 = vmatprep.subr.mxu0 0.0
    %559 = vmatpush1.xpose.msra.mxu0 %v248
    %560 = vmatprep.subr.mxu0 0.0
    %561 = vmatpush1.xpose.msra.mxu0 %v253
    %562 = vmatprep.subr.mxu0 0.0
    %563 = vmatpush1.xpose.msra.mxu0 %v258
    %564 = vmatprep.subr.mxu0 0.0
    %565 = vmatpush1.xpose.msra.mxu0 %v263
    %566 = vmatprep.subr.mxu0 0.0
    %567 = vmatpush1.xpose.msra.mxu0 %v268
    %568 = vmatprep.subr.mxu0 0.0
    %569 = vmatpush1.xpose.msra.mxu0 %v273
    %570 = vmatprep.subr.mxu0 0.0
    %571 = vmatpush1.xpose.msra.mxu0 %v278
    %572 = vmatprep.subr.mxu0 0.0
    %573 = vmatpush1.xpose.msra.mxu0 %v283
    %574 = vmatprep.subr.mxu0 0.0
    %575 = vmatpush1.xpose.msra.mxu0 %v288
    %576 = vmatprep.subr.mxu0 0.0
    %577 = vmatpush1.xpose.msra.mxu0 %v293
    %578 = vmatprep.subr.mxu0 0.0
    %579 = vmatpush1.xpose.msra.mxu0 %v298
    %580 = vmatprep.subr.mxu0 0.0
    %581 = vmatpush1.xpose.msra.mxu0 %v303
    %582 = vmatprep.subr.mxu0 0.0
    %583 = vmatpush1.xpose.msra.mxu0 %v308
    %584 = vmatprep.subr.mxu0 0.0
    %585 = vmatpush1.xpose.msra.mxu0 %v313
    %586 = vmatprep.subr.mxu0 0.0
    %587 = vmatpush1.xpose.msra.mxu0 %v318
    %588 = vmatprep.subr.mxu0 0.0
    %589 = vmatpush1.xpose.msra.mxu0 %v323
    %590 = vmatprep.subr.mxu0 0.0
    %591 = vmatpush1.xpose.msra.mxu0 %v328
    %592 = vmatprep.subr.mxu0 0.0
    %593 = vmatpush1.xpose.msra.mxu0 %v333
    %594 = vmatprep.subr.mxu0 0.0
    %595 = vmatpush1.xpose.msra.mxu0 %v338
    %596 = vmatprep.subr.mxu0 0.0
    %597 = vmatpush1.xpose.msra.mxu0 %v343
    %598 = vmatprep.subr.mxu0 0.0
    %599 = vmatpush1.xpose.msra.mxu0 %v348
    %600 = vmatprep.subr.mxu0 0.0
    %601 = vmatpush1.xpose.msra.mxu0 %v353
    %602 = vmatprep.subr.mxu0 0.0
    %603 = vmatpush1.xpose.msra.mxu0 %v358
    %604 = vmatprep.subr.mxu0 0.0
    %605 = vmatpush1.xpose.msra.mxu0 %v363
    %606 = vmatprep.subr.mxu0 0.0
    %607 = vmatpush1.xpose.msra.mxu0 %v368
    %608 = vmatprep.subr.mxu0 0.0
    %609 = vmatpush1.xpose.msra.mxu0 %v373
    %610 = vmatprep.subr.mxu0 0.0
    %611 = vmatpush1.xpose.msra.mxu0 %v378
    %612 = vmatprep.mubr.f32.mxu0 0.0
    %613 = vmatmul.mubr.f32.gmra.mrb[0].mxu0 %v414
    %v614 = vpop.f32.mrb[0].mxu0
    %v615 = vadd.f32 0.0, %v614
    %v616 = vpop.f32.mrb[0].mxu0
    %v617 = vadd.f32 0.0, %v616
    %618 = vdwg.mxu0
    %v621 = vcombine.low %v615, %v617
    %v623 = vunpack.c.l.s4 1966171168
    %v624 = vunpack.c.0.s8 %v623
    %v625 = vlaneseq
    %v626 = vshrl.u32 %v625, 7
    %v627 = vsub.s32 %v624, %v626
    %v628 = vrot.slane %v621, %v627
    %v630 = vunpack.c.l.s4 1966171168
    %v631 = vunpack.c.0.s8 %v630
    %v632 = vlaneseq
    %v633 = vshrl.u32 %v632, 7
    %v634 = vsub.s32 %v631, %v633
    %v635 = vrot.slane %v628, %v634
    %v637 = vlaneseq
    %vm638 = vcmp.ge.s32.totalorder %v637, 0
    %vm639 = vcmp.lt.s32.totalorder %v637, 256
    %vm640 = vmand %vm638, %vm639
    %641 = vst.msk [vmem:[#allocation4] sm:$0x3] %vm640, %v635
    // Predicated region
    $region14: #{tpu_custom_call.1} parent=1 // pred_check
      _
    $region15: #{tpu_custom_call.1} parent=1 // pred_check_branch
      %643 = sbr.rel (0) target = $region17
    $region16: #{tpu_custom_call.1} parent=1 // pred_region
      %s645 = ssub.s32 4096, 4096
      %646 = vsyncadd [#allocation3], %s645
      %s647 = sshll.u32 [#allocation2], 4
      %s648 = int_to_ptr.vmem [resolvable:$true] %s647
      %653 = dma.vmem_to_hbm [thread:$0]  %s648, 4096, %s3, [#allocation3], 128, 128, 8
    $region17: #{tpu_custom_call.1} parent=1 // pred_fallthru
      _
    // Predicated region
    $region18: #{tpu_custom_call.1} parent=1 // pred_check
      _
    $region19: #{tpu_custom_call.1} parent=1 // pred_check_branch
      %655 = sbr.rel (0) target = $region21
    $region20: #{tpu_custom_call.1} parent=1 // pred_region
      _
    $region21: #{tpu_custom_call.1} parent=1 // pred_fallthru
      _
    // Predicated region
    $region22: #{tpu_custom_call.1} parent=1 // pred_check
      _
    $region23: #{tpu_custom_call.1} parent=1 // pred_check_branch
      %657 = sbr.rel (0) target = $region25
    $region24: #{tpu_custom_call.1} parent=1 // pred_region
      %s659 = ssub.s32 32, 32
      %660 = vsyncadd [#allocation5], %s659
      %s662 = sshll.u32 [#allocation4], 4
      %s663 = int_to_ptr.vmem [resolvable:$true] %s662
      %665 = dma.vmem_to_hbm [thread:$0]  %s663, 32, %s5, [#allocation5]
    $region25: #{tpu_custom_call.1} parent=1 // pred_fallthru
      _
    // Predicated region
    $region26: #{tpu_custom_call.1} parent=1 // pred_check
      _
    $region27: #{tpu_custom_call.1} parent=1 // pred_check_branch
      %667 = sbr.rel (0) target = $region29
    $region28: #{tpu_custom_call.1} parent=1 // pred_region
      %668 = dma.done [#allocation3], 4096
    $region29: #{tpu_custom_call.1} parent=1 // pred_fallthru
      _
    // Predicated region
    $region30: #{tpu_custom_call.1} parent=1 // pred_check
      _
    $region31: #{tpu_custom_call.1} parent=1 // pred_check_branch
      %670 = sbr.rel (0) target = $region33
    $region32: #{tpu_custom_call.1} parent=1 // pred_region
      _
    $region33: #{tpu_custom_call.1} parent=1 // pred_fallthru
      _
    // Predicated region
    $region34: #{tpu_custom_call.1} parent=1 // pred_check
      _
    $region35: #{tpu_custom_call.1} parent=1 // pred_check_branch
      %672 = sbr.rel (0) target = $region37
    $region36: #{tpu_custom_call.1} parent=1 // pred_region
      %673 = dma.done [#allocation5], 32
    $region37: #{tpu_custom_call.1} parent=1 // pred_fallthru
      _
    %674 = vsyncpa [#allocation3], 1
    %675 = vsyncpa [#allocation5], 1

</llo_original>
